<compile_context>
chip_gen: v6e
topology: v6e:2x2x1
jax: 0.10.0
libtpu: 0.0.40
codegen_flags: <defaults>
</compile_context>

<pallas_src>
import jax
import jax.numpy as jnp
from jax.experimental import pallas as pl
from jax.experimental.pallas import tpu as pltpu  # noqa: F401  (TPU backend)

EPS = 1e-5
H = 100        # true feature count (BatchNorm1d(100))
H_PAD = 128    # lane-aligned feature count


def bnfc_kernel(x_ref, w_ref, gb_ref, out_ref):
    # x_ref: (B, 784)   w_ref: (784, 128)   gb_ref: (136, 128)   out_ref: (B, 128)
    x = x_ref[...]

    # fc0 without bias: the linear bias cancels inside BatchNorm (y - mean(y)).
    y = jnp.dot(x, w_ref[...], preferred_element_type=jnp.float32)      # (B, 128)

    # BatchNorm1d training-mode statistics (biased variance).
    # Padded columns: W cols are zero -> y == 0 -> mean = var = 0 -> xhat = 0.
    mean = jnp.mean(y, axis=0, keepdims=True)                            # (1, 128)
    centered = y - mean
    var = jnp.mean(centered * centered, axis=0, keepdims=True)           # (1, 128)
    xhat = centered * jax.lax.rsqrt(var + EPS)                           # (B, 128)
    # Note: bn2 input is -y; mean(-y) = -mean(y) and var is identical, so
    # xhat(-y) = -xhat(y). Both BN branches share this single xhat.

    # bn1.sum(dim=1) = sum(g1 * xhat) + sum(be1)
    # bn2.sum(dim=1) = sum(-g2 * xhat) + sum(be2)
    # Collapse both into one MXU contraction: G has col0 = g1, col1 = -g2, rest 0,
    # then add the precomputed beta-sum row.
    g = gb_ref[0:H_PAD, :]                                               # (128, 128)
    beta_sums = gb_ref[H_PAD:H_PAD + 1, :]                               # (1, 128)
    out_ref[...] = (
        jnp.dot(xhat, g, preferred_element_type=jnp.float32) + beta_sums
    )


def batchnorm_fc_linear_net(x, w, b, g1, be1, g2, be2):
    """x: (B, 1, 28, 28) f32; w: (100, 784); b/g1/be1/g2/be2: (100,). Returns (B, 2)."""
    bsz = x.shape[0]
    x2d = x.reshape(bsz, -1).astype(jnp.float32)      # identical to torch .view(B, -1)
    d_in = x2d.shape[1]

    # W^T, zero-padded on the feature axis to 128 lanes.
    w_t_pad = jnp.zeros((d_in, H_PAD), jnp.float32).at[:, :H].set(
        jnp.asarray(w, jnp.float32).T)

    # Single merged parameter slab (136, 128):
    #   rows 0..127 : G (col0 = gamma1, col1 = -gamma2, rest zero)
    #   row  128    : [sum(beta1), sum(beta2), 0, ...]
    #   rows 129..135: zero padding to a sublane multiple of 8
    gb = jnp.zeros((H_PAD + 8, H_PAD), jnp.float32)
    gb = gb.at[:H, 0].set(jnp.asarray(g1, jnp.float32))
    gb = gb.at[:H, 1].set(-jnp.asarray(g2, jnp.float32))
    gb = gb.at[H_PAD, 0].set(jnp.sum(jnp.asarray(be1, jnp.float32)))
    gb = gb.at[H_PAD, 1].set(jnp.sum(jnp.asarray(be2, jnp.float32)))

    del b  # linear bias is mathematically redundant (cancelled by BN mean subtraction)

    full = lambda shape: pl.BlockSpec(shape, lambda: tuple(0 for _ in shape))

    out_pad = pl.pallas_call(
        bnfc_kernel,
        out_shape=jax.ShapeDtypeStruct((bsz, H_PAD), jnp.float32),
        grid=(),
        in_specs=[
            full(x2d.shape),       # x        (B, 784)
            full(w_t_pad.shape),   # W^T pad  (784, 128)
            full(gb.shape),        # params   (136, 128)
        ],
        out_specs=full((bsz, H_PAD)),
    )(x2d, w_t_pad, gb)

    # Lane-dense (B, 128) store inside the kernel; slice to the true (B, 2) here.
    return out_pad[:, :2]


def _reference(x, w, b, g1, be1, g2, be2):
    """Pure-JAX reference mirroring PyTorch exactly (bias included, unpadded)."""
    bsz = x.shape[0]
    y = x.reshape(bsz, -1) @ w.T + b
    mean = jnp.mean(y, axis=0, keepdims=True)
    var = jnp.mean((y - mean) ** 2, axis=0, keepdims=True)
    xhat = (y - mean) / jnp.sqrt(var + EPS)
    bn1 = g1 * xhat + be1
    bn2 = g2 * (-xhat) + be2
    return jnp.stack([bn1.sum(axis=1), bn2.sum(axis=1)], axis=1)


if __name__ == "__main__":
    key = jax.random.PRNGKey(0)
    k_x, k_w, k_b, k_g1, k_b1, k_g2, k_b2 = jax.random.split(key, 7)

    B, D_IN = 8, 28 * 28

    # Deterministic synthetic params (shapes of nn.Linear(784,100) / BatchNorm1d(100)).
    x = jax.random.normal(k_x, (B, 1, 28, 28), dtype=jnp.float32)
    bound = 1.0 / (D_IN ** 0.5)
    w = jax.random.uniform(k_w, (H, D_IN), minval=-bound, maxval=bound, dtype=jnp.float32)
    b = jax.random.uniform(k_b, (H,), minval=-bound, maxval=bound, dtype=jnp.float32)
    g1 = 1.0 + 0.1 * jax.random.normal(k_g1, (H,), dtype=jnp.float32)
    be1 = 0.1 * jax.random.normal(k_b1, (H,), dtype=jnp.float32)
    g2 = 1.0 + 0.1 * jax.random.normal(k_g2, (H,), dtype=jnp.float32)
    be2 = 0.1 * jax.random.normal(k_b2, (H,), dtype=jnp.float32)

    out = batchnorm_fc_linear_net(x, w, b, g1, be1, g2, be2)
    out = jax.block_until_ready(out)

    ref = _reference(x, w, b, g1, be1, g2, be2)
    assert out.shape == (B, 2), out.shape
    assert jnp.allclose(out, ref, atol=1e-3, rtol=1e-3), (out, ref)

    print("KERNEL_OK")
</pallas_src>

<mosaic_0001>
module attributes {stable_mosaic.version = 11 : i64} {
  func.func @bnfc_kernel(%arg0: memref<8x784xf32, #tpu.memory_space<vmem>>, %arg1: memref<784x128xf32, #tpu.memory_space<vmem>>, %arg2: memref<136x128xf32, #tpu.memory_space<vmem>>, %arg3: memref<8x128xf32, #tpu.memory_space<vmem>>) attributes {dimension_semantics = [], scalar_prefetch = 0 : i64, scratch_operands = 0 : i64, tpu.core_type = #tpu.core_type<tc>} {
    %c0 = arith.constant 0 : index
    %c0_0 = arith.constant 0 : index
    %0 = vector.load %arg0[%c0, %c0_0] : memref<8x784xf32, #tpu.memory_space<vmem>>, vector<8x784xf32>
    %c0_1 = arith.constant 0 : index
    %c0_2 = arith.constant 0 : index
    %1 = vector.load %arg1[%c0_1, %c0_2] : memref<784x128xf32, #tpu.memory_space<vmem>>, vector<784x128xf32>
    %cst = arith.constant dense<0.000000e+00> : vector<8x128xf32>
    %2 = tpu.matmul %0, %1, %cst {dimension_numbers = #tpu.dot_dimension_numbers<[1], [0], [0], [1], [0, 0, 1, 1], [], []>} : vector<8x784xf32>, vector<784x128xf32>, vector<8x128xf32> -> vector<8x128xf32>
    %cst_3 = arith.constant dense<0.000000e+00> : vector<128xf32>
    %3 = vector.multi_reduction <add>, %2, %cst_3 [0] : vector<8x128xf32> to vector<128xf32>
    %4 = vector.shape_cast %3 : vector<128xf32> to vector<1x128xf32>
    %cst_4 = arith.constant 8.000000e+00 : f32
    %5 = vector.broadcast %cst_4 : f32 to vector<1x128xf32>
    %6 = arith.divf %4, %5 : vector<1x128xf32>
    %7 = vector.broadcast %6 : vector<1x128xf32> to vector<8x128xf32>
    %8 = arith.subf %2, %7 : vector<8x128xf32>
    %9 = arith.mulf %8, %8 : vector<8x128xf32>
    %cst_5 = arith.constant dense<0.000000e+00> : vector<128xf32>
    %10 = vector.multi_reduction <add>, %9, %cst_5 [0] : vector<8x128xf32> to vector<128xf32>
    %11 = vector.shape_cast %10 : vector<128xf32> to vector<1x128xf32>
    %cst_6 = arith.constant 8.000000e+00 : f32
    %12 = vector.broadcast %cst_6 : f32 to vector<1x128xf32>
    %13 = arith.divf %11, %12 : vector<1x128xf32>
    %cst_7 = arith.constant 9.99999974E-6 : f32
    %14 = vector.broadcast %cst_7 : f32 to vector<1x128xf32>
    %15 = arith.addf %13, %14 : vector<1x128xf32>
    %16 = math.rsqrt %15 : vector<1x128xf32>
    %17 = vector.broadcast %16 : vector<1x128xf32> to vector<8x128xf32>
    %18 = arith.mulf %8, %17 : vector<8x128xf32>
    %c0_8 = arith.constant 0 : index
    %c0_9 = arith.constant 0 : index
    %19 = vector.load %arg2[%c0_8, %c0_9] : memref<136x128xf32, #tpu.memory_space<vmem>>, vector<128x128xf32>
    %c128 = arith.constant 128 : index
    %c0_10 = arith.constant 0 : index
    %20 = vector.load %arg2[%c128, %c0_10] : memref<136x128xf32, #tpu.memory_space<vmem>>, vector<1x128xf32>
    %cst_11 = arith.constant dense<0.000000e+00> : vector<8x128xf32>
    %21 = tpu.matmul %18, %19, %cst_11 {dimension_numbers = #tpu.dot_dimension_numbers<[1], [0], [0], [1], [0, 0, 1, 1], [], []>} : vector<8x128xf32>, vector<128x128xf32>, vector<8x128xf32> -> vector<8x128xf32>
    %22 = vector.broadcast %20 : vector<1x128xf32> to vector<8x128xf32>
    %23 = arith.addf %21, %22 : vector<8x128xf32>
    %c0_12 = arith.constant 0 : index
    %c0_13 = arith.constant 0 : index
    %24 = vector.load %arg3[%c0_12, %c0_13] : memref<8x128xf32, #tpu.memory_space<vmem>>, vector<8x128xf32>
    tpu.vector_store %arg3[%c0_12, %c0_13], %23 {strides = array<i32>} : memref<8x128xf32, #tpu.memory_space<vmem>>, vector<8x128xf32>,
    return
  }
}

</mosaic_0001>

<llo_original>
// kernel: tpu_custom_call.1
$region0: #{tpu_custom_call.1}
  #allocation0 [shape = 'u32[]', space=smem, size = 0x4, offset = 0x4, fixed_abs, tag = 'smem constant byte address 0x4 - core index']
  #allocation1 [shape = 'u32[144,128]{1,0:T(1,128)}', space=vmem, size = 0x12000, scoped, tag = 'internal scratch']
  %s0 = inlined_call_operand.hbm [shape: f32[8,784], index: 0, kind: input, shape index: {}]
  %s1 = inlined_call_operand.hbm [shape: f32[784,128], index: 1, kind: input, shape index: {}]
  %s2 = inlined_call_operand.hbm [shape: f32[136,128], index: 2, kind: input, shape index: {}]
  %s3 = inlined_call_operand.hbm [shape: f32[8,128], index: 3, kind: output, shape index: {}]
  %s4 = sld [smem:[#allocation0]]
  $region34: #{tpu_custom_call.1} parent=0
    _
  %s6 = ssub.s32 1, %s4
  %s7 = scalar_select 0, %s6, %s4
  $region1: #{tpu_custom_call.1} parent=0
    #allocation2 [shape = 'u8[28672]{0}', space=vmem, size = 0x7000, scoped, tag = 'input window, operand 0, single buffered']
    #allocation3 [shape = 's32[1]{0}', space=sflag, size = 0x4, scoped, tag = 'scoped memory for tpu_custom_call.1']
    #allocation4 [shape = 's32[1]{0}', space=sflag, size = 0x4, scoped, tag = 'scoped memory for tpu_custom_call.1']
    #allocation5 [shape = 'u8[401408]{0}', space=vmem, size = 0x62000, scoped, tag = 'input window, operand 1, single buffered']
    #allocation6 [shape = 's32[1]{0}', space=sflag, size = 0x4, scoped, tag = 'scoped memory for tpu_custom_call.1']
    #allocation7 [shape = 'u8[69632]{0}', space=vmem, size = 0x11000, scoped, tag = 'input window, operand 2, single buffered']
    #allocation8 [shape = 'u8[4096]{0}', space=vmem, size = 0x1000, scoped, tag = 'output window, operand 0, single buffered']
    %8 = vsyncpa [#allocation3], 0
    %9 = vsyncpa [#allocation6], 0
    %10 = vsyncpa [#allocation4], 0
    // Predicated region
    $region2: #{tpu_custom_call.1} parent=1 // pred_check
      _
    $region3: #{tpu_custom_call.1} parent=1 // pred_check_branch
      %12 = sbr.rel (0) target = $region5
    $region4: #{tpu_custom_call.1} parent=1 // pred_region
      %s14 = ssub.s32 896, 896
      %15 = vsyncadd [#allocation3], %s14
      %s17 = sshll.u32 [#allocation2], 4
      %s18 = int_to_ptr.vmem [resolvable:$true] %s17
      %20 = dma.hbm_to_vmem [thread:$0]  %s0, 896, %s18, [#allocation3]
    $region5: #{tpu_custom_call.1} parent=1 // pred_fallthru
      _
    // Predicated region
    $region6: #{tpu_custom_call.1} parent=1 // pred_check
      _
    $region7: #{tpu_custom_call.1} parent=1 // pred_check_branch
      %22 = sbr.rel (0) target = $region9
    $region8: #{tpu_custom_call.1} parent=1 // pred_region
      %s24 = ssub.s32 12544, 12544
      %25 = vsyncadd [#allocation6], %s24
      %s26 = sshll.u32 [#allocation5], 4
      %s27 = int_to_ptr.vmem [resolvable:$true] %s26
      %32 = dma.hbm_to_vmem [thread:$0]  %s1, 12544, %s27, [#allocation6], 128, 128, 8
    $region9: #{tpu_custom_call.1} parent=1 // pred_fallthru
      _
    // Predicated region
    $region10: #{tpu_custom_call.1} parent=1 // pred_check
      _
    $region11: #{tpu_custom_call.1} parent=1 // pred_check_branch
      %34 = sbr.rel (0) target = $region13
    $region12: #{tpu_custom_call.1} parent=1 // pred_region
      %s36 = ssub.s32 2176, 2176
      %37 = vsyncadd [#allocation6], %s36
      %s38 = sshll.u32 [#allocation7], 4
      %s39 = int_to_ptr.vmem [resolvable:$true] %s38
      %44 = dma.hbm_to_vmem [thread:$0]  %s2, 2176, %s39, [#allocation6], 128, 128, 8
    $region13: #{tpu_custom_call.1} parent=1 // pred_fallthru
      _
    // Predicated region
    $region14: #{tpu_custom_call.1} parent=1 // pred_check
      _
    $region15: #{tpu_custom_call.1} parent=1 // pred_check_branch
      %46 = sbr.rel (0) target = $region17
    $region16: #{tpu_custom_call.1} parent=1 // pred_region
      %47 = dma.done [#allocation3], 896
    $region17: #{tpu_custom_call.1} parent=1 // pred_fallthru
      _
    // Predicated region
    $region18: #{tpu_custom_call.1} parent=1 // pred_check
      _
    $region19: #{tpu_custom_call.1} parent=1 // pred_check_branch
      %49 = sbr.rel (0) target = $region21
    $region20: #{tpu_custom_call.1} parent=1 // pred_region
      %50 = dma.done [#allocation6], 12544
    $region21: #{tpu_custom_call.1} parent=1 // pred_fallthru
      _
    // Predicated region
    $region22: #{tpu_custom_call.1} parent=1 // pred_check
      _
    $region23: #{tpu_custom_call.1} parent=1 // pred_check_branch
      %52 = sbr.rel (0) target = $region25
    $region24: #{tpu_custom_call.1} parent=1 // pred_region
      %53 = dma.done [#allocation6], 2176
    $region25: #{tpu_custom_call.1} parent=1 // pred_fallthru
      _
    %v54 = vld [vmem:[#allocation2] sm:$0xff]
    %v55 = vld [vmem:[#allocation2 + $0x8] sm:$0xff]
    %v56 = vld [vmem:[#allocation2 + $0x10] sm:$0xff]
    %v57 = vld [vmem:[#allocation2 + $0x18] sm:$0xff]
    %v58 = vld [vmem:[#allocation2 + $0x20] sm:$0xff]
    %v59 = vld [vmem:[#allocation2 + $0x28] sm:$0xff]
    %v60 = vld [vmem:[#allocation2 + $0x30] sm:$0xff]
    %v61 = vld [vmem:[#allocation5] sm:$0xff]
    %v62 = vld [vmem:[#allocation5 + $0x8] sm:$0xff]
    %v63 = vld [vmem:[#allocation5 + $0x10] sm:$0xff]
    %v64 = vld [vmem:[#allocation5 + $0x18] sm:$0xff]
    %v65 = vld [vmem:[#allocation5 + $0x20] sm:$0xff]
    %v66 = vld [vmem:[#allocation5 + $0x28] sm:$0xff]
    %v67 = vld [vmem:[#allocation5 + $0x30] sm:$0xff]
    %v68 = vld [vmem:[#allocation5 + $0x38] sm:$0xff]
    %v69 = vld [vmem:[#allocation5 + $0x40] sm:$0xff]
    %v70 = vld [vmem:[#allocation5 + $0x48] sm:$0xff]
    %v71 = vld [vmem:[#allocation5 + $0x50] sm:$0xff]
    %v72 = vld [vmem:[#allocation5 + $0x58] sm:$0xff]
    %v73 = vld [vmem:[#allocation5 + $0x60] sm:$0xff]
    %v74 = vld [vmem:[#allocation5 + $0x68] sm:$0xff]
    %v75 = vld [vmem:[#allocation5 + $0x70] sm:$0xff]
    %v76 = vld [vmem:[#allocation5 + $0x78] sm:$0xff]
    %v77 = vld [vmem:[#allocation5 + $0x80] sm:$0xff]
    %v78 = vld [vmem:[#allocation5 + $0x88] sm:$0xff]
    %v79 = vld [vmem:[#allocation5 + $0x90] sm:$0xff]
    %v80 = vld [vmem:[#allocation5 + $0x98] sm:$0xff]
    %v81 = vld [vmem:[#allocation5 + $0xa0] sm:$0xff]
    %v82 = vld [vmem:[#allocation5 + $0xa8] sm:$0xff]
    %v83 = vld [vmem:[#allocation5 + $0xb0] sm:$0xff]
    %v84 = vld [vmem:[#allocation5 + $0xb8] sm:$0xff]
    %v85 = vld [vmem:[#allocation5 + $0xc0] sm:$0xff]
    %v86 = vld [vmem:[#allocation5 + $0xc8] sm:$0xff]
    %v87 = vld [vmem:[#allocation5 + $0xd0] sm:$0xff]
    %v88 = vld [vmem:[#allocation5 + $0xd8] sm:$0xff]
    %v89 = vld [vmem:[#allocation5 + $0xe0] sm:$0xff]
    %v90 = vld [vmem:[#allocation5 + $0xe8] sm:$0xff]
    %v91 = vld [vmem:[#allocation5 + $0xf0] sm:$0xff]
    %v92 = vld [vmem:[#allocation5 + $0xf8] sm:$0xff]
    %v93 = vld [vmem:[#allocation5 + $0x100] sm:$0xff]
    %v94 = vld [vmem:[#allocation5 + $0x108] sm:$0xff]
    %v95 = vld [vmem:[#allocation5 + $0x110] sm:$0xff]
    %v96 = vld [vmem:[#allocation5 + $0x118] sm:$0xff]
    %v97 = vld [vmem:[#allocation5 + $0x120] sm:$0xff]
    %v98 = vld [vmem:[#allocation5 + $0x128] sm:$0xff]
    %v99 = vld [vmem:[#allocation5 + $0x130] sm:$0xff]
    %v100 = vld [vmem:[#allocation5 + $0x138] sm:$0xff]
    %v101 = vld [vmem:[#allocation5 + $0x140] sm:$0xff]
    %v102 = vld [vmem:[#allocation5 + $0x148] sm:$0xff]
    %v103 = vld [vmem:[#allocation5 + $0x150] sm:$0xff]
    %v104 = vld [vmem:[#allocation5 + $0x158] sm:$0xff]
    %v105 = vld [vmem:[#allocation5 + $0x160] sm:$0xff]
    %v106 = vld [vmem:[#allocation5 + $0x168] sm:$0xff]
    %v107 = vld [vmem:[#allocation5 + $0x170] sm:$0xff]
    %v108 = vld [vmem:[#allocation5 + $0x178] sm:$0xff]
    %v109 = vld [vmem:[#allocation5 + $0x180] sm:$0xff]
    %v110 = vld [vmem:[#allocation5 + $0x188] sm:$0xff]
    %v111 = vld [vmem:[#allocation5 + $0x190] sm:$0xff]
    %v112 = vld [vmem:[#allocation5 + $0x198] sm:$0xff]
    %v113 = vld [vmem:[#allocation5 + $0x1a0] sm:$0xff]
    %v114 = vld [vmem:[#allocation5 + $0x1a8] sm:$0xff]
    %v115 = vld [vmem:[#allocation5 + $0x1b0] sm:$0xff]
    %v116 = vld [vmem:[#allocation5 + $0x1b8] sm:$0xff]
    %v117 = vld [vmem:[#allocation5 + $0x1c0] sm:$0xff]
    %v118 = vld [vmem:[#allocation5 + $0x1c8] sm:$0xff]
    %v119 = vld [vmem:[#allocation5 + $0x1d0] sm:$0xff]
    %v120 = vld [vmem:[#allocation5 + $0x1d8] sm:$0xff]
    %v121 = vld [vmem:[#allocation5 + $0x1e0] sm:$0xff]
    %v122 = vld [vmem:[#allocation5 + $0x1e8] sm:$0xff]
    %v123 = vld [vmem:[#allocation5 + $0x1f0] sm:$0xff]
    %v124 = vld [vmem:[#allocation5 + $0x1f8] sm:$0xff]
    %v125 = vld [vmem:[#allocation5 + $0x200] sm:$0xff]
    %v126 = vld [vmem:[#allocation5 + $0x208] sm:$0xff]
    %v127 = vld [vmem:[#allocation5 + $0x210] sm:$0xff]
    %v128 = vld [vmem:[#allocation5 + $0x218] sm:$0xff]
    %v129 = vld [vmem:[#allocation5 + $0x220] sm:$0xff]
    %v130 = vld [vmem:[#allocation5 + $0x228] sm:$0xff]
    %v131 = vld [vmem:[#allocation5 + $0x230] sm:$0xff]
    %v132 = vld [vmem:[#allocation5 + $0x238] sm:$0xff]
    %v133 = vld [vmem:[#allocation5 + $0x240] sm:$0xff]
    %v134 = vld [vmem:[#allocation5 + $0x248] sm:$0xff]
    %v135 = vld [vmem:[#allocation5 + $0x250] sm:$0xff]
    %v136 = vld [vmem:[#allocation5 + $0x258] sm:$0xff]
    %v137 = vld [vmem:[#allocation5 + $0x260] sm:$0xff]
    %v138 = vld [vmem:[#allocation5 + $0x268] sm:$0xff]
    %v139 = vld [vmem:[#allocation5 + $0x270] sm:$0xff]
    %v140 = vld [vmem:[#allocation5 + $0x278] sm:$0xff]
    %v141 = vld [vmem:[#allocation5 + $0x280] sm:$0xff]
    %v142 = vld [vmem:[#allocation5 + $0x288] sm:$0xff]
    %v143 = vld [vmem:[#allocation5 + $0x290] sm:$0xff]
    %v144 = vld [vmem:[#allocation5 + $0x298] sm:$0xff]
    %v145 = vld [vmem:[#allocation5 + $0x2a0] sm:$0xff]
    %v146 = vld [vmem:[#allocation5 + $0x2a8] sm:$0xff]
    %v147 = vld [vmem:[#allocation5 + $0x2b0] sm:$0xff]
    %v148 = vld [vmem:[#allocation5 + $0x2b8] sm:$0xff]
    %v149 = vld [vmem:[#allocation5 + $0x2c0] sm:$0xff]
    %v150 = vld [vmem:[#allocation5 + $0x2c8] sm:$0xff]
    %v151 = vld [vmem:[#allocation5 + $0x2d0] sm:$0xff]
    %v152 = vld [vmem:[#allocation5 + $0x2d8] sm:$0xff]
    %v153 = vld [vmem:[#allocation5 + $0x2e0] sm:$0xff]
    %v154 = vld [vmem:[#allocation5 + $0x2e8] sm:$0xff]
    %v155 = vld [vmem:[#allocation5 + $0x2f0] sm:$0xff]
    %v156 = vld [vmem:[#allocation5 + $0x2f8] sm:$0xff]
    %v157 = vld [vmem:[#allocation5 + $0x300] sm:$0xff]
    %v158 = vld [vmem:[#allocation5 + $0x308] sm:$0xff]
    %vm159 = vcmask 130048
    %v161 = vsel %vm159, %v60, 0
    %163 = vmatprep.subr.mxu0 0.0
    %164 = vmatpush1.msra.mxu0 %v76
    %165 = vmatprep.subr.mxu0 0.0
    %166 = vmatpush1.msra.mxu0 %v75
    %167 = vmatprep.subr.mxu0 0.0
    %168 = vmatpush1.msra.mxu0 %v74
    %169 = vmatprep.subr.mxu0 0.0
    %170 = vmatpush1.msra.mxu0 %v73
    %171 = vmatprep.subr.mxu0 0.0
    %172 = vmatpush1.msra.mxu0 %v72
    %173 = vmatprep.subr.mxu0 0.0
    %174 = vmatpush1.msra.mxu0 %v71
    %175 = vmatprep.subr.mxu0 0.0
    %176 = vmatpush1.msra.mxu0 %v70
    %177 = vmatprep.subr.mxu0 0.0
    %178 = vmatpush1.msra.mxu0 %v69
    %179 = vmatprep.subr.mxu0 0.0
    %180 = vmatpush1.msra.mxu0 %v68
    %181 = vmatprep.subr.mxu0 0.0
    %182 = vmatpush1.msra.mxu0 %v67
    %183 = vmatprep.subr.mxu0 0.0
    %184 = vmatpush1.msra.mxu0 %v66
    %185 = vmatprep.subr.mxu0 0.0
    %186 = vmatpush1.msra.mxu0 %v65
    %187 = vmatprep.subr.mxu0 0.0
    %188 = vmatpush1.msra.mxu0 %v64
    %189 = vmatprep.subr.mxu0 0.0
    %190 = vmatpush1.msra.mxu0 %v63
    %191 = vmatprep.subr.mxu0 0.0
    %192 = vmatpush1.msra.mxu0 %v62
    %193 = vmatprep.subr.mxu0 0.0
    %194 = vmatpush1.msra.mxu0 %v61
    %195 = vmatprep.subr.mxu0 0.0
    %196 = vmatpush2.msra.mxu0 %v92
    %197 = vmatprep.subr.mxu0 0.0
    %198 = vmatpush2.msra.mxu0 %v91
    %199 = vmatprep.subr.mxu0 0.0
    %200 = vmatpush2.msra.mxu0 %v90
    %201 = vmatprep.subr.mxu0 0.0
    %202 = vmatpush2.msra.mxu0 %v89
    %203 = vmatprep.subr.mxu0 0.0
    %204 = vmatpush2.msra.mxu0 %v88
    %205 = vmatprep.subr.mxu0 0.0
    %206 = vmatpush2.msra.mxu0 %v87
    %207 = vmatprep.subr.mxu0 0.0
    %208 = vmatpush2.msra.mxu0 %v86
    %209 = vmatprep.subr.mxu0 0.0
    %210 = vmatpush2.msra.mxu0 %v85
    %211 = vmatprep.subr.mxu0 0.0
    %212 = vmatpush2.msra.mxu0 %v84
    %213 = vmatprep.subr.mxu0 0.0
    %214 = vmatpush2.msra.mxu0 %v83
    %215 = vmatprep.subr.mxu0 0.0
    %216 = vmatpush2.msra.mxu0 %v82
    %217 = vmatprep.subr.mxu0 0.0
    %218 = vmatpush2.msra.mxu0 %v81
    %219 = vmatprep.subr.mxu0 0.0
    %220 = vmatpush2.msra.mxu0 %v80
    %221 = vmatprep.subr.mxu0 0.0
    %222 = vmatpush2.msra.mxu0 %v79
    %223 = vmatprep.subr.mxu0 0.0
    %224 = vmatpush2.msra.mxu0 %v78
    %225 = vmatprep.subr.mxu0 0.0
    %226 = vmatpush2.msra.mxu0 %v77
    %227 = vmatprep.mubr.f32.mxu0 %v55
    %228 = vmatmul.mubr.f32.gmra.mxu0 %v54
    %v229 = vpop.f32.mrf.mxu0
    %v230 = vadd.f32 0.0, %v229
    %v231 = vpop.f32.mrf.mxu0
    %232 = vdwg.mxu0
    %233 = vmatprep.subr.mxu0 0.0
    %234 = vmatpush1.msra.mxu0 %v108
    %235 = vmatprep.subr.mxu0 0.0
    %236 = vmatpush1.msra.mxu0 %v107
    %237 = vmatprep.subr.mxu0 0.0
    %238 = vmatpush1.msra.mxu0 %v106
    %239 = vmatprep.subr.mxu0 0.0
    %240 = vmatpush1.msra.mxu0 %v105
    %241 = vmatprep.subr.mxu0 0.0
    %242 = vmatpush1.msra.mxu0 %v104
    %243 = vmatprep.subr.mxu0 0.0
    %244 = vmatpush1.msra.mxu0 %v103
    %245 = vmatprep.subr.mxu0 0.0
    %246 = vmatpush1.msra.mxu0 %v102
    %247 = vmatprep.subr.mxu0 0.0
    %248 = vmatpush1.msra.mxu0 %v101
    %249 = vmatprep.subr.mxu0 0.0
    %250 = vmatpush1.msra.mxu0 %v100
    %251 = vmatprep.subr.mxu0 0.0
    %252 = vmatpush1.msra.mxu0 %v99
    %253 = vmatprep.subr.mxu0 0.0
    %254 = vmatpush1.msra.mxu0 %v98
    %255 = vmatprep.subr.mxu0 0.0
    %256 = vmatpush1.msra.mxu0 %v97
    %257 = vmatprep.subr.mxu0 0.0
    %258 = vmatpush1.msra.mxu0 %v96
    %259 = vmatprep.subr.mxu0 0.0
    %260 = vmatpush1.msra.mxu0 %v95
    %261 = vmatprep.subr.mxu0 0.0
    %262 = vmatpush1.msra.mxu0 %v94
    %263 = vmatprep.subr.mxu0 0.0
    %264 = vmatpush1.msra.mxu0 %v93
    %265 = vmatprep.subr.mxu0 0.0
    %266 = vmatpush2.msra.mxu0 %v124
    %267 = vmatprep.subr.mxu0 0.0
    %268 = vmatpush2.msra.mxu0 %v123
    %269 = vmatprep.subr.mxu0 0.0
    %270 = vmatpush2.msra.mxu0 %v122
    %271 = vmatprep.subr.mxu0 0.0
    %272 = vmatpush2.msra.mxu0 %v121
    %273 = vmatprep.subr.mxu0 0.0
    %274 = vmatpush2.msra.mxu0 %v120
    %275 = vmatprep.subr.mxu0 0.0
    %276 = vmatpush2.msra.mxu0 %v119
    %277 = vmatprep.subr.mxu0 0.0
    %278 = vmatpush2.msra.mxu0 %v118
    %279 = vmatprep.subr.mxu0 0.0
    %280 = vmatpush2.msra.mxu0 %v117
    %281 = vmatprep.subr.mxu0 0.0
    %282 = vmatpush2.msra.mxu0 %v116
    %283 = vmatprep.subr.mxu0 0.0
    %284 = vmatpush2.msra.mxu0 %v115
    %285 = vmatprep.subr.mxu0 0.0
    %286 = vmatpush2.msra.mxu0 %v114
    %287 = vmatprep.subr.mxu0 0.0
    %288 = vmatpush2.msra.mxu0 %v113
    %289 = vmatprep.subr.mxu0 0.0
    %290 = vmatpush2.msra.mxu0 %v112
    %291 = vmatprep.subr.mxu0 0.0
    %292 = vmatpush2.msra.mxu0 %v111
    %293 = vmatprep.subr.mxu0 0.0
    %294 = vmatpush2.msra.mxu0 %v110
    %295 = vmatprep.subr.mxu0 0.0
    %296 = vmatpush2.msra.mxu0 %v109
    %297 = vmatprep.mubr.f32.mxu0 %v57
    %298 = vmatmul.mubr.f32.gmra.mxu0 %v56
    %v299 = vpop.f32.mrf.mxu0
    %v300 = vadd.f32 %v230, %v299
    %v301 = vpop.f32.mrf.mxu0
    %302 = vdwg.mxu0
    %303 = vmatprep.subr.mxu0 0.0
    %304 = vmatpush1.msra.mxu0 %v140
    %305 = vmatprep.subr.mxu0 0.0
    %306 = vmatpush1.msra.mxu0 %v139
    %307 = vmatprep.subr.mxu0 0.0
    %308 = vmatpush1.msra.mxu0 %v138
    %309 = vmatprep.subr.mxu0 0.0
    %310 = vmatpush1.msra.mxu0 %v137
    %311 = vmatprep.subr.mxu0 0.0
    %312 = vmatpush1.msra.mxu0 %v136
    %313 = vmatprep.subr.mxu0 0.0
    %314 = vmatpush1.msra.mxu0 %v135
    %315 = vmatprep.subr.mxu0 0.0
    %316 = vmatpush1.msra.mxu0 %v134
    %317 = vmatprep.subr.mxu0 0.0
    %318 = vmatpush1.msra.mxu0 %v133
    %319 = vmatprep.subr.mxu0 0.0
    %320 = vmatpush1.msra.mxu0 %v132
    %321 = vmatprep.subr.mxu0 0.0
    %322 = vmatpush1.msra.mxu0 %v131
    %323 = vmatprep.subr.mxu0 0.0
    %324 = vmatpush1.msra.mxu0 %v130
    %325 = vmatprep.subr.mxu0 0.0
    %326 = vmatpush1.msra.mxu0 %v129
    %327 = vmatprep.subr.mxu0 0.0
    %328 = vmatpush1.msra.mxu0 %v128
    %329 = vmatprep.subr.mxu0 0.0
    %330 = vmatpush1.msra.mxu0 %v127
    %331 = vmatprep.subr.mxu0 0.0
    %332 = vmatpush1.msra.mxu0 %v126
    %333 = vmatprep.subr.mxu0 0.0
    %334 = vmatpush1.msra.mxu0 %v125
    %335 = vmatprep.subr.mxu0 0.0
    %336 = vmatpush2.msra.mxu0 %v156
    %337 = vmatprep.subr.mxu0 0.0
    %338 = vmatpush2.msra.mxu0 %v155
    %339 = vmatprep.subr.mxu0 0.0
    %340 = vmatpush2.msra.mxu0 %v154
    %341 = vmatprep.subr.mxu0 0.0
    %342 = vmatpush2.msra.mxu0 %v153
    %343 = vmatprep.subr.mxu0 0.0
    %344 = vmatpush2.msra.mxu0 %v152
    %345 = vmatprep.subr.mxu0 0.0
    %346 = vmatpush2.msra.mxu0 %v151
    %347 = vmatprep.subr.mxu0 0.0
    %348 = vmatpush2.msra.mxu0 %v150
    %349 = vmatprep.subr.mxu0 0.0
    %350 = vmatpush2.msra.mxu0 %v149
    %351 = vmatprep.subr.mxu0 0.0
    %352 = vmatpush2.msra.mxu0 %v148
    %353 = vmatprep.subr.mxu0 0.0
    %354 = vmatpush2.msra.mxu0 %v147
    %355 = vmatprep.subr.mxu0 0.0
    %356 = vmatpush2.msra.mxu0 %v146
    %357 = vmatprep.subr.mxu0 0.0
    %358 = vmatpush2.msra.mxu0 %v145
    %359 = vmatprep.subr.mxu0 0.0
    %360 = vmatpush2.msra.mxu0 %v144
    %361 = vmatprep.subr.mxu0 0.0
    %362 = vmatpush2.msra.mxu0 %v143
    %363 = vmatprep.subr.mxu0 0.0
    %364 = vmatpush2.msra.mxu0 %v142
    %365 = vmatprep.subr.mxu0 0.0
    %366 = vmatpush2.msra.mxu0 %v141
    %367 = vmatprep.mubr.f32.mxu0 %v59
    %368 = vmatmul.mubr.f32.gmra.mxu0 %v58
    %v369 = vpop.f32.mrf.mxu0
    %v370 = vadd.f32 %v300, %v369
    %v371 = vpop.f32.mrf.mxu0
    %372 = vdwg.mxu0
    %373 = vmatprep.subr.mxu0 0.0
    %374 = vmatpush1.msra.mxu0 0.0
    %375 = vmatprep.subr.mxu0 0.0
    %376 = vmatpush1.msra.mxu0 0.0
    %377 = vmatprep.subr.mxu0 0.0
    %378 = vmatpush1.msra.mxu0 0.0
    %379 = vmatprep.subr.mxu0 0.0
    %380 = vmatpush1.msra.mxu0 0.0
    %381 = vmatprep.subr.mxu0 0.0
    %382 = vmatpush1.msra.mxu0 0.0
    %383 = vmatprep.subr.mxu0 0.0
    %384 = vmatpush1.msra.mxu0 0.0
    %385 = vmatprep.subr.mxu0 0.0
    %386 = vmatpush1.msra.mxu0 0.0
    %387 = vmatprep.subr.mxu0 0.0
    %388 = vmatpush1.msra.mxu0 0.0
    %389 = vmatprep.subr.mxu0 0.0
    %390 = vmatpush1.msra.mxu0 0.0
    %391 = vmatprep.subr.mxu0 0.0
    %392 = vmatpush1.msra.mxu0 0.0
    %393 = vmatprep.subr.mxu0 0.0
    %394 = vmatpush1.msra.mxu0 0.0
    %395 = vmatprep.subr.mxu0 0.0
    %396 = vmatpush1.msra.mxu0 0.0
    %397 = vmatprep.subr.mxu0 0.0
    %398 = vmatpush1.msra.mxu0 0.0
    %399 = vmatprep.subr.mxu0 0.0
    %400 = vmatpush1.msra.mxu0 0.0
    %401 = vmatprep.subr.mxu0 0.0
    %402 = vmatpush1.msra.mxu0 %v158
    %403 = vmatprep.subr.mxu0 0.0
    %404 = vmatpush1.msra.mxu0 %v157
    %405 = vmatprep.subr.mxu0 0.0
    %406 = vmatpush2.msra.mxu0 0.0
    %407 = vmatprep.subr.mxu0 0.0
    %408 = vmatpush2.msra.mxu0 0.0
    %409 = vmatprep.subr.mxu0 0.0
    %410 = vmatpush2.msra.mxu0 0.0
    %411 = vmatprep.subr.mxu0 0.0
    %412 = vmatpush2.msra.mxu0 0.0
    %413 = vmatprep.subr.mxu0 0.0
    %414 = vmatpush2.msra.mxu0 0.0
    %415 = vmatprep.subr.mxu0 0.0
    %416 = vmatpush2.msra.mxu0 0.0
    %417 = vmatprep.subr.mxu0 0.0
    %418 = vmatpush2.msra.mxu0 0.0
    %419 = vmatprep.subr.mxu0 0.0
    %420 = vmatpush2.msra.mxu0 0.0
    %421 = vmatprep.subr.mxu0 0.0
    %422 = vmatpush2.msra.mxu0 0.0
    %423 = vmatprep.subr.mxu0 0.0
    %424 = vmatpush2.msra.mxu0 0.0
    %425 = vmatprep.subr.mxu0 0.0
    %426 = vmatpush2.msra.mxu0 0.0
    %427 = vmatprep.subr.mxu0 0.0
    %428 = vmatpush2.msra.mxu0 0.0
    %429 = vmatprep.subr.mxu0 0.0
    %430 = vmatpush2.msra.mxu0 0.0
    %431 = vmatprep.subr.mxu0 0.0
    %432 = vmatpush2.msra.mxu0 0.0
    %433 = vmatprep.subr.mxu0 0.0
    %434 = vmatpush2.msra.mxu0 0.0
    %435 = vmatprep.subr.mxu0 0.0
    %436 = vmatpush2.msra.mxu0 0.0
    %437 = vmatprep.mubr.f32.mxu0 0.0
    %438 = vmatmul.mubr.f32.gmra.mxu0 %v161
    %v439 = vpop.f32.mrf.mxu0
    %v440 = vadd.f32 %v370, %v439
    %v441 = vpop.f32.mrf.mxu0
    %442 = vdwg.mxu0
    %v443 = vrot.slane %v440, 4
    %v444 = vadd.f32 %v440, %v443
    %v445 = vrot.slane %v444, 2
    %v446 = vadd.f32 %v444, %v445
    %v447 = vrot.slane %v446, 1
    %v448 = vadd.f32 %v446, %v447
    %v449 = vrcp.pop 8.0
    %v450 = vmul.f32 %v448, %v449
    %v451 = vsub.f32 %v440, %v450
    %v452 = vmul.f32 %v451, %v451
    %v453 = vrot.slane %v452, 4
    %v454 = vadd.f32 %v452, %v453
    %v455 = vrot.slane %v454, 2
    %v456 = vadd.f32 %v454, %v455
    %v457 = vrot.slane %v456, 1
    %v458 = vadd.f32 %v456, %v457
    %v459 = vmul.f32 %v458, %v449
    %v460 = vadd.f32 %v459, 1e-05
    %v461 = vrsqrt.pop %v460
    %v462 = vmul.f32 %v451, %v461
    %v463 = vld [vmem:[#allocation7] sm:$0xff]
    %v464 = vld [vmem:[#allocation7 + $0x8] sm:$0xff]
    %v465 = vld [vmem:[#allocation7 + $0x10] sm:$0xff]
    %v466 = vld [vmem:[#allocation7 + $0x18] sm:$0xff]
    %v467 = vld [vmem:[#allocation7 + $0x20] sm:$0xff]
    %v468 = vld [vmem:[#allocation7 + $0x28] sm:$0xff]
    %v469 = vld [vmem:[#allocation7 + $0x30] sm:$0xff]
    %v470 = vld [vmem:[#allocation7 + $0x38] sm:$0xff]
    %v471 = vld [vmem:[#allocation7 + $0x40] sm:$0xff]
    %v472 = vld [vmem:[#allocation7 + $0x48] sm:$0xff]
    %v473 = vld [vmem:[#allocation7 + $0x50] sm:$0xff]
    %v474 = vld [vmem:[#allocation7 + $0x58] sm:$0xff]
    %v475 = vld [vmem:[#allocation7 + $0x60] sm:$0xff]
    %v476 = vld [vmem:[#allocation7 + $0x68] sm:$0xff]
    %v477 = vld [vmem:[#allocation7 + $0x70] sm:$0xff]
    %v478 = vld [vmem:[#allocation7 + $0x78] sm:$0xff]
    %v479 = vld [vmem:[#allocation7 + $0x80] sm:$0x1]
    %v480 = vlaneseq
    %v481 = vshrl.u32 %v480, 7
    %v482 = vsub.s32 0, %v481
    %v483 = vrot.slane %v479, %v482
    %484 = vmatprep.subr.mxu0 0.0
    %485 = vmatpush1.msra.mxu0 %v478
    %486 = vmatprep.subr.mxu0 0.0
    %487 = vmatpush1.msra.mxu0 %v477
    %488 = vmatprep.subr.mxu0 0.0
    %489 = vmatpush1.msra.mxu0 %v476
    %490 = vmatprep.subr.mxu0 0.0
    %491 = vmatpush1.msra.mxu0 %v475
    %492 = vmatprep.subr.mxu0 0.0
    %493 = vmatpush1.msra.mxu0 %v474
    %494 = vmatprep.subr.mxu0 0.0
    %495 = vmatpush1.msra.mxu0 %v473
    %496 = vmatprep.subr.mxu0 0.0
    %497 = vmatpush1.msra.mxu0 %v472
    %498 = vmatprep.subr.mxu0 0.0
    %499 = vmatpush1.msra.mxu0 %v471
    %500 = vmatprep.subr.mxu0 0.0
    %501 = vmatpush1.msra.mxu0 %v470
    %502 = vmatprep.subr.mxu0 0.0
    %503 = vmatpush1.msra.mxu0 %v469
    %504 = vmatprep.subr.mxu0 0.0
    %505 = vmatpush1.msra.mxu0 %v468
    %506 = vmatprep.subr.mxu0 0.0
    %507 = vmatpush1.msra.mxu0 %v467
    %508 = vmatprep.subr.mxu0 0.0
    %509 = vmatpush1.msra.mxu0 %v466
    %510 = vmatprep.subr.mxu0 0.0
    %511 = vmatpush1.msra.mxu0 %v465
    %512 = vmatprep.subr.mxu0 0.0
    %513 = vmatpush1.msra.mxu0 %v464
    %514 = vmatprep.subr.mxu0 0.0
    %515 = vmatpush1.msra.mxu0 %v463
    %516 = vmatprep.subr.mxu0 0.0
    %517 = vmatpush2.msra.mxu0 0.0
    %518 = vmatprep.subr.mxu0 0.0
    %519 = vmatpush2.msra.mxu0 0.0
    %520 = vmatprep.subr.mxu0 0.0
    %521 = vmatpush2.msra.mxu0 0.0
    %522 = vmatprep.subr.mxu0 0.0
    %523 = vmatpush2.msra.mxu0 0.0
    %524 = vmatprep.subr.mxu0 0.0
    %525 = vmatpush2.msra.mxu0 0.0
    %526 = vmatprep.subr.mxu0 0.0
    %527 = vmatpush2.msra.mxu0 0.0
    %528 = vmatprep.subr.mxu0 0.0
    %529 = vmatpush2.msra.mxu0 0.0
    %530 = vmatprep.subr.mxu0 0.0
    %531 = vmatpush2.msra.mxu0 0.0
    %532 = vmatprep.subr.mxu0 0.0
    %533 = vmatpush2.msra.mxu0 0.0
    %534 = vmatprep.subr.mxu0 0.0
    %535 = vmatpush2.msra.mxu0 0.0
    %536 = vmatprep.subr.mxu0 0.0
    %537 = vmatpush2.msra.mxu0 0.0
    %538 = vmatprep.subr.mxu0 0.0
    %539 = vmatpush2.msra.mxu0 0.0
    %540 = vmatprep.subr.mxu0 0.0
    %541 = vmatpush2.msra.mxu0 0.0
    %542 = vmatprep.subr.mxu0 0.0
    %543 = vmatpush2.msra.mxu0 0.0
    %544 = vmatprep.subr.mxu0 0.0
    %545 = vmatpush2.msra.mxu0 0.0
    %546 = vmatprep.subr.mxu0 0.0
    %547 = vmatpush2.msra.mxu0 0.0
    %548 = vmatprep.mubr.f32.mxu0 0.0
    %549 = vmatmul.mubr.f32.gmra.mxu0 %v462
    %v550 = vpop.f32.mrf.mxu0
    %v551 = vadd.f32 %v483, %v550
    %v552 = vpop.f32.mrf.mxu0
    %553 = vdwg.mxu0
    %554 = vst [vmem:[#allocation8] sm:$0xff] %v551
    // Predicated region
    $region26: #{tpu_custom_call.1} parent=1 // pred_check
      _
    $region27: #{tpu_custom_call.1} parent=1 // pred_check_branch
      %556 = sbr.rel (0) target = $region29
    $region28: #{tpu_custom_call.1} parent=1 // pred_region
      %s558 = ssub.s32 128, 128
      %559 = vsyncadd [#allocation4], %s558
      %s561 = sshll.u32 [#allocation8], 4
      %s562 = int_to_ptr.vmem [resolvable:$true] %s561
      %564 = dma.vmem_to_hbm [thread:$0]  %s562, 128, %s3, [#allocation4]
    $region29: #{tpu_custom_call.1} parent=1 // pred_fallthru
      _
    // Predicated region
    $region30: #{tpu_custom_call.1} parent=1 // pred_check
      _
    $region31: #{tpu_custom_call.1} parent=1 // pred_check_branch
      %566 = sbr.rel (0) target = $region33
    $region32: #{tpu_custom_call.1} parent=1 // pred_region
      %567 = dma.done [#allocation4], 128
    $region33: #{tpu_custom_call.1} parent=1 // pred_fallthru
      _
    %568 = vsyncpa [#allocation3], 1
    %569 = vsyncpa [#allocation6], 1
    %570 = vsyncpa [#allocation4], 1

</llo_original>
